<compile_context>
chip_gen: v5e
topology: v5e:2x2
jax: 0.10.0
libtpu: 0.0.40
codegen_flags: <defaults>
</compile_context>

<pallas_src>
import functools

import jax
import jax.numpy as jnp
from jax.experimental import pallas as pl
from jax.experimental.pallas import tpu as pltpu

FEATURES = 50
HIDDEN = FEATURES
NUM_CLASSES = 2
NEG_SLOPE = 0.01      # nn.LeakyReLU default
NEG_BIG = -1.0e30     # bias for padded class lanes -> exp() == 0 in softmax


def _round_up(x, m):
    return ((x + m - 1) // m) * m


def mlp_kernel(x_ref, w1_ref, b1_ref, w2_ref, b2_ref, o_ref):
    # Whole forward fused in VMEM: two MXU matmuls (f32 accumulation) plus
    # VPU elementwise.  Inputs may be f32 or bf16; biases are f32.
    x = x_ref[...]
    w1 = w1_ref[...]
    w2 = w2_ref[...]

    # l1: x @ W1 + b1  (f32 accumulate)
    h = jnp.dot(x, w1, preferred_element_type=jnp.float32) + b1_ref[...]

    # LeakyReLU(negative_slope=0.01) in f32
    h = jnp.where(h > 0, h, NEG_SLOPE * h)

    # l2: h @ W2 + b2  (match W2's compute dtype on the MXU, accumulate f32)
    z = jnp.dot(h.astype(w2.dtype), w2, preferred_element_type=jnp.float32)
    z = z + b2_ref[...]

    # Numerically stable softmax over the (padded, lane-dense) class axis.
    # Padded classes have bias -1e30 -> exp() underflows to exactly 0.
    # Exact division keeps each row summing to 1.0 to f32 precision.
    z = z - jnp.max(z, axis=-1, keepdims=True)
    e = jnp.exp(z)
    denom = jnp.sum(e, axis=-1, keepdims=True)
    o_ref[...] = (e / denom).astype(o_ref.dtype)


@functools.partial(jax.jit, static_argnames=("compute_dtype", "block_rows"))
def network_forward(x, w1, b1, w2, b2, *, compute_dtype=jnp.float32,
                    block_rows=512):
    B, F = x.shape
    H = w1.shape[1]
    C = w2.shape[1]

    # Lane-dense padded sizes (last dims multiples of 128).
    FP = _round_up(F, 128)
    HP = _round_up(H, 128)
    CP = _round_up(C, 128)

    # Batch tile: multiple of 8 sublanes, capped so small batches stay small.
    # Per-step VMEM footprint (f32, double-buffered x/out) at TB=512 is ~1 MiB
    # -> comfortably inside the scoped VMEM default on every chip.
    TB = min(block_rows, _round_up(B, 8))
    B_pad = _round_up(B, TB)
    grid = (B_pad // TB,)

    # Host-side zero padding; padded class lanes get a -1e30 bias so they are
    # excluded from the softmax.  Matmul operands may be cast to bf16.
    cdt = compute_dtype
    x_p = jnp.zeros((B_pad, FP), cdt).at[:B, :F].set(x.astype(cdt))
    w1_p = jnp.zeros((FP, HP), cdt).at[:F, :H].set(w1.astype(cdt))
    b1_p = jnp.zeros((1, HP), jnp.float32).at[:, :H].set(b1.reshape(1, H))
    w2_p = jnp.zeros((HP, CP), cdt).at[:H, :C].set(w2.astype(cdt))
    b2_p = jnp.full((1, CP), NEG_BIG, jnp.float32).at[:, :C].set(b2.reshape(1, C))

    out_p = pl.pallas_call(
        mlp_kernel,
        out_shape=jax.ShapeDtypeStruct((B_pad, CP), jnp.float32),
        grid=grid,
        in_specs=[
            pl.BlockSpec((TB, FP), lambda i: (i, 0)),   # x: streamed over batch
            pl.BlockSpec((FP, HP), lambda i: (0, 0)),   # W1: resident
            pl.BlockSpec((1, HP), lambda i: (0, 0)),    # b1: resident
            pl.BlockSpec((HP, CP), lambda i: (0, 0)),   # W2: resident
            pl.BlockSpec((1, CP), lambda i: (0, 0)),    # b2: resident
        ],
        out_specs=pl.BlockSpec((TB, CP), lambda i: (i, 0)),
        compiler_params=pltpu.CompilerParams(
            dimension_semantics=("parallel",)),          # shard batch on v7x's 2 TCs
    )(x_p, w1_p, b1_p, w2_p, b2_p)

    # Drop batch padding and the padded class lanes.
    return out_p[:B, :C]


def init_params(key):
    # Deterministic init mimicking nn.Linear's U(-1/sqrt(fan_in), 1/sqrt(fan_in)).
    k1, k2, k3, k4 = jax.random.split(key, 4)
    bound1 = 1.0 / jnp.sqrt(FEATURES)
    bound2 = 1.0 / jnp.sqrt(HIDDEN)
    w1 = jax.random.uniform(k1, (FEATURES, HIDDEN), jnp.float32, -bound1, bound1)
    b1 = jax.random.uniform(k2, (1, HIDDEN), jnp.float32, -bound1, bound1)
    w2 = jax.random.uniform(k3, (HIDDEN, NUM_CLASSES), jnp.float32, -bound2, bound2)
    b2 = jax.random.uniform(k4, (1, NUM_CLASSES), jnp.float32, -bound2, bound2)
    return w1, b1, w2, b2


def reference_forward(x, w1, b1, w2, b2):
    h = x @ w1 + b1
    h = jnp.where(h > 0, h, NEG_SLOPE * h)
    z = h @ w2 + b2
    return jax.nn.softmax(z, axis=1)


if __name__ == "__main__":
    key = jax.random.PRNGKey(0)
    kx, kp, kb = jax.random.split(key, 3)

    w1, b1, w2, b2 = init_params(kp)

    # --- small batch, f32 compute ---
    batch = 8
    x = jax.random.normal(kx, (batch, FEATURES), jnp.float32)
    out = jax.block_until_ready(network_forward(x, w1, b1, w2, b2))
    ref = reference_forward(x, w1, b1, w2, b2)
    assert out.shape == (batch, NUM_CLASSES)
    assert jnp.allclose(out, ref, atol=1e-5, rtol=1e-5)
    assert jnp.allclose(jnp.sum(out, axis=1), 1.0, atol=1e-5)

    # --- larger (non-multiple-of-tile) batch, bf16 matmul inputs ---
    big_batch = 1031
    xb = jax.random.normal(kb, (big_batch, FEATURES), jnp.float32)
    out_b = jax.block_until_ready(
        network_forward(xb, w1, b1, w2, b2, compute_dtype=jnp.bfloat16))
    ref_b = reference_forward(xb, w1, b1, w2, b2)
    assert out_b.shape == (big_batch, NUM_CLASSES)
    assert jnp.allclose(out_b, ref_b, atol=5e-2, rtol=5e-2)
    assert jnp.allclose(jnp.sum(out_b, axis=1), 1.0, atol=1e-3)

    print("KERNEL_OK")
</pallas_src>

<mosaic_0001>
module attributes {stable_mosaic.version = 11 : i64} {
  func.func @mlp_kernel(%arg0: i32, %arg1: memref<8x128xf32, #tpu.memory_space<vmem>>, %arg2: memref<128x128xf32, #tpu.memory_space<vmem>>, %arg3: memref<1x128xf32, #tpu.memory_space<vmem>>, %arg4: memref<128x128xf32, #tpu.memory_space<vmem>>, %arg5: memref<1x128xf32, #tpu.memory_space<vmem>>, %arg6: memref<8x128xf32, #tpu.memory_space<vmem>>) attributes {dimension_semantics = [#tpu.dimension_semantics<parallel>], iteration_bounds = array<i64: 1>, scalar_prefetch = 0 : i64, scratch_operands = 0 : i64, tpu.core_type = #tpu.core_type<tc>, window_params = [{transform_indices = @transform_0, window_bounds = array<i64: 8, 128>}, {pipeline_mode = #tpu.pipeline_mode<synchronous>, transform_indices = @transform_1, window_bounds = array<i64: 128, 128>}, {pipeline_mode = #tpu.pipeline_mode<synchronous>, transform_indices = @transform_2, window_bounds = array<i64: 1, 128>}, {pipeline_mode = #tpu.pipeline_mode<synchronous>, transform_indices = @transform_3, window_bounds = array<i64: 128, 128>}, {pipeline_mode = #tpu.pipeline_mode<synchronous>, transform_indices = @transform_4, window_bounds = array<i64: 1, 128>}, {transform_indices = @transform_5, window_bounds = array<i64: 8, 128>}]} {
    %c0 = arith.constant 0 : index
    %c0_0 = arith.constant 0 : index
    %0 = vector.load %arg1[%c0, %c0_0] : memref<8x128xf32, #tpu.memory_space<vmem>>, vector<8x128xf32>
    %c0_1 = arith.constant 0 : index
    %c0_2 = arith.constant 0 : index
    %1 = vector.load %arg2[%c0_1, %c0_2] : memref<128x128xf32, #tpu.memory_space<vmem>>, vector<128x128xf32>
    %c0_3 = arith.constant 0 : index
    %c0_4 = arith.constant 0 : index
    %2 = vector.load %arg4[%c0_3, %c0_4] : memref<128x128xf32, #tpu.memory_space<vmem>>, vector<128x128xf32>
    %cst = arith.constant dense<0.000000e+00> : vector<8x128xf32>
    %3 = tpu.matmul %0, %1, %cst {dimension_numbers = #tpu.dot_dimension_numbers<[1], [0], [0], [1], [0, 0, 1, 1], [], []>} : vector<8x128xf32>, vector<128x128xf32>, vector<8x128xf32> -> vector<8x128xf32>
    %c0_5 = arith.constant 0 : index
    %c0_6 = arith.constant 0 : index
    %4 = vector.load %arg3[%c0_5, %c0_6] : memref<1x128xf32, #tpu.memory_space<vmem>>, vector<1x128xf32>
    %5 = vector.broadcast %4 : vector<1x128xf32> to vector<8x128xf32>
    %6 = arith.addf %3, %5 : vector<8x128xf32>
    %cst_7 = arith.constant 0.000000e+00 : f32
    %7 = vector.broadcast %cst_7 : f32 to vector<8x128xf32>
    %8 = arith.cmpf ogt, %6, %7 : vector<8x128xf32>
    %cst_8 = arith.constant 0.00999999977 : f32
    %9 = vector.broadcast %cst_8 : f32 to vector<8x128xf32>
    %10 = arith.mulf %9, %6 : vector<8x128xf32>
    %11 = arith.select %8, %6, %10 : vector<8x128xi1>, vector<8x128xf32>
    %cst_9 = arith.constant dense<0.000000e+00> : vector<8x128xf32>
    %12 = tpu.matmul %11, %2, %cst_9 {dimension_numbers = #tpu.dot_dimension_numbers<[1], [0], [0], [1], [0, 0, 1, 1], [], []>} : vector<8x128xf32>, vector<128x128xf32>, vector<8x128xf32> -> vector<8x128xf32>
    %c0_10 = arith.constant 0 : index
    %c0_11 = arith.constant 0 : index
    %13 = vector.load %arg5[%c0_10, %c0_11] : memref<1x128xf32, #tpu.memory_space<vmem>>, vector<1x128xf32>
    %14 = vector.broadcast %13 : vector<1x128xf32> to vector<8x128xf32>
    %15 = arith.addf %12, %14 : vector<8x128xf32>
    %cst_12 = arith.constant dense<0xFF800000> : vector<8xf32>
    %16 = vector.multi_reduction <maximumf>, %15, %cst_12 [1] : vector<8x128xf32> to vector<8xf32>
    %17 = vector.shape_cast %16 : vector<8xf32> to vector<8x1xf32>
    %18 = vector.broadcast %17 : vector<8x1xf32> to vector<8x128xf32>
    %19 = arith.subf %15, %18 : vector<8x128xf32>
    %20 = math.exp %19 : vector<8x128xf32>
    %cst_13 = arith.constant dense<0.000000e+00> : vector<8xf32>
    %21 = vector.multi_reduction <add>, %20, %cst_13 [1] : vector<8x128xf32> to vector<8xf32>
    %22 = vector.shape_cast %21 : vector<8xf32> to vector<8x1xf32>
    %23 = vector.broadcast %22 : vector<8x1xf32> to vector<8x128xf32>
    %24 = arith.divf %20, %23 : vector<8x128xf32>
    %c0_14 = arith.constant 0 : index
    %c0_15 = arith.constant 0 : index
    %25 = vector.load %arg6[%c0_14, %c0_15] : memref<8x128xf32, #tpu.memory_space<vmem>>, vector<8x128xf32>
    tpu.vector_store %arg6[%c0_14, %c0_15], %24 {strides = array<i32>} : memref<8x128xf32, #tpu.memory_space<vmem>>, vector<8x128xf32>,
    return
  }
  func.func @transform_0(%arg0: i32) -> (i32, i32) {
    %c0_i32 = arith.constant 0 : i32
    %c0_i32_0 = arith.constant 0 : i32
    return %arg0, %c0_i32 : i32, i32
  }
  func.func @transform_1(%arg0: i32) -> (i32, i32) {
    %c0_i32 = arith.constant 0 : i32
    %c0_i32_0 = arith.constant 0 : i32
    %c0_i32_1 = arith.constant 0 : i32
    return %c0_i32, %c0_i32_0 : i32, i32
  }
  func.func @transform_2(%arg0: i32) -> (i32, i32) {
    %c0_i32 = arith.constant 0 : i32
    %c0_i32_0 = arith.constant 0 : i32
    %c0_i32_1 = arith.constant 0 : i32
    return %c0_i32, %c0_i32_0 : i32, i32
  }
  func.func @transform_3(%arg0: i32) -> (i32, i32) {
    %c0_i32 = arith.constant 0 : i32
    %c0_i32_0 = arith.constant 0 : i32
    %c0_i32_1 = arith.constant 0 : i32
    return %c0_i32, %c0_i32_0 : i32, i32
  }
  func.func @transform_4(%arg0: i32) -> (i32, i32) {
    %c0_i32 = arith.constant 0 : i32
    %c0_i32_0 = arith.constant 0 : i32
    %c0_i32_1 = arith.constant 0 : i32
    return %c0_i32, %c0_i32_0 : i32, i32
  }
  func.func @transform_5(%arg0: i32) -> (i32, i32) {
    %c0_i32 = arith.constant 0 : i32
    %c0_i32_0 = arith.constant 0 : i32
    return %arg0, %c0_i32 : i32, i32
  }
}

</mosaic_0001>

<llo_original>
// kernel: network_forward.1
$region0: #{network_forward.1}
  #allocation0 [shape = 'u32[]', space=smem, size = 0x4, offset = 0x4, fixed_abs, tag = 'smem constant byte address 0x4 - core index']
  #allocation1 [shape = 'u32[72,128]{1,0:T(1,128)}', space=vmem, size = 0x9000, scoped, tag = 'internal scratch']
  %s0 = inlined_call_operand.vmem [shape: f32[8,128], index: 0, kind: input, shape index: {}]
  %s1 = inlined_call_operand.vmem [shape: f32[128,128], index: 1, kind: input, shape index: {}]
  %s2 = inlined_call_operand.vmem [shape: f32[1,128], index: 2, kind: input, shape index: {}]
  %s3 = inlined_call_operand.vmem [shape: f32[128,128], index: 3, kind: input, shape index: {}]
  %s4 = inlined_call_operand.vmem [shape: f32[1,128], index: 4, kind: input, shape index: {}]
  %s5 = inlined_call_operand.vmem [shape: f32[8,128], index: 5, kind: output, shape index: {}]
  %s6 = sld [smem:[#allocation0]]
  $region30: #{network_forward.1} parent=0
    _
  %s8 = ssub.s32 1, %s6
  %s9 = scalar_select 0, %s8, %s6
  // Predicated region
  $region2: #{network_forward.1} parent=0 // pred_check
    _
  $region3: #{network_forward.1} parent=0 // pred_check_branch
    %11 = sbr.rel (0) target = $region5
  $region4: #{network_forward.1} parent=0 // pred_region
    _
  $region5: #{network_forward.1} parent=0 // pred_fallthru
    _
  // Predicated region
  $region6: #{network_forward.1} parent=0 // pred_check
    _
  $region7: #{network_forward.1} parent=0 // pred_check_branch
    %13 = sbr.rel (0) target = $region9
  $region8: #{network_forward.1} parent=0 // pred_region
    _
  $region9: #{network_forward.1} parent=0 // pred_fallthru
    _
  // Predicated region
  $region10: #{network_forward.1} parent=0 // pred_check
    _
  $region11: #{network_forward.1} parent=0 // pred_check_branch
    %15 = sbr.rel (0) target = $region13
  $region12: #{network_forward.1} parent=0 // pred_region
    _
  $region13: #{network_forward.1} parent=0 // pred_fallthru
    _
  // Predicated region
  $region14: #{network_forward.1} parent=0 // pred_check
    _
  $region15: #{network_forward.1} parent=0 // pred_check_branch
    %17 = sbr.rel (0) target = $region17
  $region16: #{network_forward.1} parent=0 // pred_region
    _
  $region17: #{network_forward.1} parent=0 // pred_fallthru
    _
  // Predicated region
  $region18: #{network_forward.1} parent=0 // pred_check
    _
  $region19: #{network_forward.1} parent=0 // pred_check_branch
    %19 = sbr.rel (0) target = $region21
  $region20: #{network_forward.1} parent=0 // pred_region
    _
  $region21: #{network_forward.1} parent=0 // pred_fallthru
    _
  %v20 = vld [vmem:[%s0] sm:$0xff]
  %v21 = vld [vmem:[%s1] sm:$0xff]
  %v22 = vld [vmem:[%s1 + $0x8] sm:$0xff]
  %v23 = vld [vmem:[%s1 + $0x10] sm:$0xff]
  %v24 = vld [vmem:[%s1 + $0x18] sm:$0xff]
  %v25 = vld [vmem:[%s1 + $0x20] sm:$0xff]
  %v26 = vld [vmem:[%s1 + $0x28] sm:$0xff]
  %v27 = vld [vmem:[%s1 + $0x30] sm:$0xff]
  %v28 = vld [vmem:[%s1 + $0x38] sm:$0xff]
  %v29 = vld [vmem:[%s1 + $0x40] sm:$0xff]
  %v30 = vld [vmem:[%s1 + $0x48] sm:$0xff]
  %v31 = vld [vmem:[%s1 + $0x50] sm:$0xff]
  %v32 = vld [vmem:[%s1 + $0x58] sm:$0xff]
  %v33 = vld [vmem:[%s1 + $0x60] sm:$0xff]
  %v34 = vld [vmem:[%s1 + $0x68] sm:$0xff]
  %v35 = vld [vmem:[%s1 + $0x70] sm:$0xff]
  %v36 = vld [vmem:[%s1 + $0x78] sm:$0xff]
  %v37 = vld [vmem:[%s3] sm:$0xff]
  %v38 = vld [vmem:[%s3 + $0x8] sm:$0xff]
  %v39 = vld [vmem:[%s3 + $0x10] sm:$0xff]
  %v40 = vld [vmem:[%s3 + $0x18] sm:$0xff]
  %v41 = vld [vmem:[%s3 + $0x20] sm:$0xff]
  %v42 = vld [vmem:[%s3 + $0x28] sm:$0xff]
  %v43 = vld [vmem:[%s3 + $0x30] sm:$0xff]
  %v44 = vld [vmem:[%s3 + $0x38] sm:$0xff]
  %v45 = vld [vmem:[%s3 + $0x40] sm:$0xff]
  %v46 = vld [vmem:[%s3 + $0x48] sm:$0xff]
  %v47 = vld [vmem:[%s3 + $0x50] sm:$0xff]
  %v48 = vld [vmem:[%s3 + $0x58] sm:$0xff]
  %v49 = vld [vmem:[%s3 + $0x60] sm:$0xff]
  %v50 = vld [vmem:[%s3 + $0x68] sm:$0xff]
  %v51 = vld [vmem:[%s3 + $0x70] sm:$0xff]
  %v52 = vld [vmem:[%s3 + $0x78] sm:$0xff]
  %v53 = vld [vmem:[%s2] sm:$0x1]
  %v55 = vperm.slane %v53, 0
  %57 = vmatpush.msra.mxu0 %v36
  %58 = vmatpush.msra.mxu0 %v35
  %59 = vmatpush.msra.mxu0 %v34
  %60 = vmatpush.msra.mxu0 %v33
  %61 = vmatpush.msra.mxu0 %v32
  %62 = vmatpush.msra.mxu0 %v31
  %63 = vmatpush.msra.mxu0 %v30
  %64 = vmatpush.msra.mxu0 %v29
  %65 = vmatpush.msra.mxu0 %v28
  %66 = vmatpush.msra.mxu0 %v27
  %67 = vmatpush.msra.mxu0 %v26
  %68 = vmatpush.msra.mxu0 %v25
  %69 = vmatpush.msra.mxu0 %v24
  %70 = vmatpush.msra.mxu0 %v23
  %71 = vmatpush.msra.mxu0 %v22
  %72 = vmatpush.msra.mxu0 %v21
  %73 = vmatmul.f32.gmra.mxu0 %v20
  %v74 = vpop.f32.mrf.mxu0
  %v75 = vadd.f32 %v55, %v74
  %76 = vdwg.mxu0
  %vm77 = vcmp.gt.f32.partialorder %v75, 0.0
  %v78 = vmul.f32 %v75, 0.01
  %v79 = vsel %vm77, %v75, %v78
  %v80 = vld [vmem:[%s4] sm:$0x1]
  %v82 = vperm.slane %v80, 0
  %84 = vmatpush.msra.mxu0 %v52
  %85 = vmatpush.msra.mxu0 %v51
  %86 = vmatpush.msra.mxu0 %v50
  %87 = vmatpush.msra.mxu0 %v49
  %88 = vmatpush.msra.mxu0 %v48
  %89 = vmatpush.msra.mxu0 %v47
  %90 = vmatpush.msra.mxu0 %v46
  %91 = vmatpush.msra.mxu0 %v45
  %92 = vmatpush.msra.mxu0 %v44
  %93 = vmatpush.msra.mxu0 %v43
  %94 = vmatpush.msra.mxu0 %v42
  %95 = vmatpush.msra.mxu0 %v41
  %96 = vmatpush.msra.mxu0 %v40
  %97 = vmatpush.msra.mxu0 %v39
  %98 = vmatpush.msra.mxu0 %v38
  %99 = vmatpush.msra.mxu0 %v37
  %100 = vmatmul.f32.gmra.mxu0 %v79
  %v101 = vpop.f32.mrf.mxu0
  %v102 = vadd.f32 %v82, %v101
  %103 = vdwg.mxu0
  %104 = vmax.xlane.f32.xlu0 %v102
  %v105 = vpop.xlane.xlu0 %104
  %v106 = vsub.f32 %v102, %v105
  %v107 = vmul.f32 %v106, 1.442695
  %v108 = vpow.pop %v107
  %109 = vadd.xlane.f32.xlu0 %v108
  %v110 = vpop.xlane.xlu0 %109
  %v111 = vrcp.pop %v110
  %v112 = vmul.f32 %v110, %v111
  %v113 = vsub.f32 1.0, %v112
  %v114 = vmul.f32 %v111, %v113
  %v115 = vadd.f32 %v111, %v114
  %vm116 = vweird.f32 %v110
  %vm117 = vweird.f32 %v111
  %vm118 = vmor %vm116, %vm117
  %v119 = vsel %vm118, %v111, %v115
  %v120 = vand.u32 2147483647, %v110
  %vm121 = vcmp.eq.f32.partialorder %v120, 8.507059e+37
  %v122 = vand.u32 %v110, 2147483648
  %v123 = vor.u32 1.1754944e-38, %v122
  %v124 = vsel %vm121, %v123, %v119
  %v125 = vmul.f32 %v108, %v124
  %126 = vst [vmem:[%s5] sm:$0xff] %v125
  // Predicated region
  $region22: #{network_forward.1} parent=0 // pred_check
    _
  $region23: #{network_forward.1} parent=0 // pred_check_branch
    %128 = sbr.rel (0) target = $region25
  $region24: #{network_forward.1} parent=0 // pred_region
    _
  $region25: #{network_forward.1} parent=0 // pred_fallthru
    _
  // Predicated region
  $region26: #{network_forward.1} parent=0 // pred_check
    _
  $region27: #{network_forward.1} parent=0 // pred_check_branch
    %130 = sbr.rel (0) target = $region29
  $region28: #{network_forward.1} parent=0 // pred_region
    _
  $region29: #{network_forward.1} parent=0 // pred_fallthru
    _

</llo_original>
